<compile_context>
chip_gen: v7x
topology: tpu7x:2x2x1
jax: 0.10.0
libtpu: 0.0.40
codegen_flags: <defaults>
</compile_context>

<pallas_src>
import functools

import jax
import jax.numpy as jnp
from jax.experimental import pallas as pl
from jax.experimental.pallas import tpu as pltpu


def _vn_layer_kernel(x_ref, w_ref, b_ref, o_ref):
    # x_ref : (C_in, tS)    activation tile, spatial points on lanes
    # w_ref : (C_out, C_in) BN-scale-folded conv weight (VMEM-resident)
    # b_ref : (C_out, 1)    folded BN bias (VMEM-resident)
    # o_ref : (C_out, tS)
    y = jnp.dot(w_ref[...], x_ref[...], preferred_element_type=jnp.float32)
    o_ref[...] = jnp.maximum(y + b_ref[...], 0.0).astype(o_ref.dtype)


def vector_neuron_layer(x, conv_weight, bn_gamma, bn_beta, bn_mean, bn_var,
                        *, eps=1e-5, block_s=2048):
    """relu(batchnorm2d_eval(conv2d_1x1(x))) for x: (B, C_in, H, W)."""
    B, C_in, H, W = x.shape
    C_out = conv_weight.shape[0]
    S = H * W

    # Fold eval-mode BatchNorm into the conv weight (scale) and a bias:
    #   bn(conv(x)) = scale * (W @ x) + bias = (scale * W) @ x + bias
    scale = (bn_gamma.astype(jnp.float32)
             / jnp.sqrt(bn_var.astype(jnp.float32) + eps))
    bias = (bn_beta.astype(jnp.float32)
            - bn_mean.astype(jnp.float32) * scale).reshape(C_out, 1)
    w = (conv_weight.reshape(C_out, C_in).astype(jnp.float32)
         * scale[:, None]).astype(x.dtype)

    # Lane-dense spatial layout: (B, C_in, S) with S split into 128-aligned
    # tiles of size tS.  Cap tS so double-buffered in+out tiles fit VMEM.
    itemsize = jnp.dtype(x.dtype).itemsize
    vmem_budget = 8 * 1024 * 1024
    per_col = (C_in + C_out) * itemsize * 2          # 2x = double buffering
    ts_cap = max(128, (vmem_budget // max(per_col, 1)) // 128 * 128)
    tS = max(128, min(int(block_s), int(ts_cap), pl.cdiv(S, 128) * 128))
    Sp = pl.cdiv(S, tS) * tS

    xs = x.reshape(B, C_in, S)
    if Sp != S:
        xs = jnp.pad(xs, ((0, 0), (0, 0), (0, Sp - S)))

    grid = (B, Sp // tS)
    cost = pl.CostEstimate(
        flops=2 * B * Sp * C_in * C_out,
        transcendentals=0,
        bytes_accessed=(B * C_in * Sp + B * C_out * Sp) * itemsize
        + C_out * C_in * itemsize + C_out * 4,
    )

    out = pl.pallas_call(
        _vn_layer_kernel,
        out_shape=jax.ShapeDtypeStruct((B, C_out, Sp), x.dtype),
        grid=grid,
        in_specs=[
            # Activations: tiled over (batch, spatial-tile); batch squeezed.
            pl.BlockSpec((None, C_in, tS), lambda b, s: (b, 0, s)),
            # Folded weight / bias: constant block index -> VMEM-resident.
            pl.BlockSpec((C_out, C_in), lambda b, s: (0, 0)),
            pl.BlockSpec((C_out, 1), lambda b, s: (0, 0)),
        ],
        out_specs=pl.BlockSpec((None, C_out, tS), lambda b, s: (b, 0, s)),
        compiler_params=pltpu.CompilerParams(
            dimension_semantics=("parallel", "parallel")),
        cost_estimate=cost,
    )(xs, w, bias)

    return out[:, :, :S].reshape(B, C_out, H, W)


def _reference(x, conv_weight, gamma, beta, mean, var, eps=1e-5):
    # Pure-JAX reference: Conv2d(1x1, bias=False) + eval-mode BN + ReLU.
    w = conv_weight.reshape(conv_weight.shape[0], conv_weight.shape[1])
    y = jnp.einsum('oi,bihw->bohw', w, x)
    y = ((y - mean[None, :, None, None])
         / jnp.sqrt(var + eps)[None, :, None, None]
         * gamma[None, :, None, None] + beta[None, :, None, None])
    return jnp.maximum(y, 0.0)


if __name__ == "__main__":
    B, C_IN, C_OUT, H, W = 2, 4, 32, 16, 16
    key = jax.random.PRNGKey(0)
    kx, kw, kg, kb, km, kv = jax.random.split(key, 6)
    x = jax.random.normal(kx, (B, C_IN, H, W), dtype=jnp.float32)
    conv_w = 0.5 * jax.random.normal(kw, (C_OUT, C_IN, 1, 1), dtype=jnp.float32)
    gamma = 1.0 + 0.1 * jax.random.normal(kg, (C_OUT,), dtype=jnp.float32)
    beta = 0.1 * jax.random.normal(kb, (C_OUT,), dtype=jnp.float32)
    mean = 0.1 * jax.random.normal(km, (C_OUT,), dtype=jnp.float32)
    var = 0.5 + jnp.abs(jax.random.normal(kv, (C_OUT,), dtype=jnp.float32))

    # block_s=128 with S=256 gives grid=(B, 2): exercises real tiling.
    fwd = jax.jit(functools.partial(vector_neuron_layer, eps=1e-5, block_s=128))
    out = fwd(x, conv_w, gamma, beta, mean, var)
    jax.block_until_ready(out)

    ref = _reference(x, conv_w, gamma, beta, mean, var, eps=1e-5)
    assert out.shape == (B, C_OUT, H, W)
    assert bool(jnp.all(jnp.isfinite(out)))
    assert bool(jnp.allclose(out, ref, atol=2e-2, rtol=2e-2)), (
        float(jnp.max(jnp.abs(out - ref))))
    print("KERNEL_OK")
</pallas_src>

<mosaic_0001>
module attributes {stable_mosaic.version = 11 : i64} {
  func.func @_vn_layer_kernel(%arg0: i32, %arg1: i32, %arg2: memref<1x4x128xf32, #tpu.memory_space<vmem>>, %arg3: memref<32x4xf32, #tpu.memory_space<vmem>>, %arg4: memref<32x1xf32, #tpu.memory_space<vmem>>, %arg5: memref<1x32x128xf32, #tpu.memory_space<vmem>>) attributes {dimension_semantics = [#tpu.dimension_semantics<parallel>, #tpu.dimension_semantics<parallel>], iteration_bounds = array<i64: 2, 2>, scalar_prefetch = 0 : i64, scratch_operands = 0 : i64, tpu.core_type = #tpu.core_type<tc>, window_params = [{transform_indices = @transform_0, window_bounds = array<i64: 1, 4, 128>}, {pipeline_mode = #tpu.pipeline_mode<synchronous>, transform_indices = @transform_1, window_bounds = array<i64: 32, 4>}, {pipeline_mode = #tpu.pipeline_mode<synchronous>, transform_indices = @transform_2, window_bounds = array<i64: 32, 1>}, {transform_indices = @transform_3, window_bounds = array<i64: 1, 32, 128>}]} {
    %c0 = arith.constant 0 : index
    %c0_0 = arith.constant 0 : index
    %0 = vector.load %arg3[%c0, %c0_0] : memref<32x4xf32, #tpu.memory_space<vmem>>, vector<32x4xf32>
    %c0_1 = arith.constant 0 : index
    %c0_2 = arith.constant 0 : index
    %c0_3 = arith.constant 0 : index
    %1 = vector.load %arg2[%c0_1, %c0_2, %c0_3] : memref<1x4x128xf32, #tpu.memory_space<vmem>>, vector<1x4x128xf32>
    %2 = vector.shape_cast %1 : vector<1x4x128xf32> to vector<4x128xf32>
    %cst = arith.constant dense<0.000000e+00> : vector<32x128xf32>
    %3 = tpu.matmul %0, %2, %cst {dimension_numbers = #tpu.dot_dimension_numbers<[1], [0], [0], [1], [0, 0, 1, 1], [], []>} : vector<32x4xf32>, vector<4x128xf32>, vector<32x128xf32> -> vector<32x128xf32>
    %c0_4 = arith.constant 0 : index
    %c0_5 = arith.constant 0 : index
    %4 = vector.load %arg4[%c0_4, %c0_5] : memref<32x1xf32, #tpu.memory_space<vmem>>, vector<32x1xf32>
    %5 = vector.broadcast %4 : vector<32x1xf32> to vector<32x128xf32>
    %6 = arith.addf %3, %5 : vector<32x128xf32>
    %cst_6 = arith.constant 0.000000e+00 : f32
    %7 = vector.broadcast %cst_6 : f32 to vector<32x128xf32>
    %8 = arith.maximumf %6, %7 : vector<32x128xf32>
    %c0_7 = arith.constant 0 : index
    %c0_8 = arith.constant 0 : index
    %c0_9 = arith.constant 0 : index
    %9 = vector.load %arg5[%c0_7, %c0_8, %c0_9] : memref<1x32x128xf32, #tpu.memory_space<vmem>>, vector<1x32x128xf32>
    %10 = vector.shape_cast %9 : vector<1x32x128xf32> to vector<32x128xf32>
    %11 = vector.shape_cast %8 : vector<32x128xf32> to vector<1x32x128xf32>
    tpu.vector_store %arg5[%c0_7, %c0_8, %c0_9], %11 {strides = array<i32>} : memref<1x32x128xf32, #tpu.memory_space<vmem>>, vector<1x32x128xf32>,
    return
  }
  func.func @transform_0(%arg0: i32, %arg1: i32) -> (i32, i32, i32) {
    %c0_i32 = arith.constant 0 : i32
    %c0_i32_0 = arith.constant 0 : i32
    return %arg0, %c0_i32, %arg1 : i32, i32, i32
  }
  func.func @transform_1(%arg0: i32, %arg1: i32) -> (i32, i32) {
    %c0_i32 = arith.constant 0 : i32
    %c0_i32_0 = arith.constant 0 : i32
    %c0_i32_1 = arith.constant 0 : i32
    return %c0_i32, %c0_i32_0 : i32, i32
  }
  func.func @transform_2(%arg0: i32, %arg1: i32) -> (i32, i32) {
    %c0_i32 = arith.constant 0 : i32
    %c0_i32_0 = arith.constant 0 : i32
    %c0_i32_1 = arith.constant 0 : i32
    return %c0_i32, %c0_i32_0 : i32, i32
  }
  func.func @transform_3(%arg0: i32, %arg1: i32) -> (i32, i32, i32) {
    %c0_i32 = arith.constant 0 : i32
    %c0_i32_0 = arith.constant 0 : i32
    return %arg0, %c0_i32, %arg1 : i32, i32, i32
  }
}

</mosaic_0001>

<llo_original>
// kernel: vector_neuron_layer.1
$region0: #{vector_neuron_layer.1}
  #allocation0 [shape = 'u32[]', space=smem, size = 0x4, offset = 0x4, fixed_abs, tag = 'smem constant byte address 0x4 - core index']
  #allocation1 [shape = 'u32[144,128]{1,0:T(1,128)}', space=vmem, size = 0x12000, scoped, tag = 'internal scratch']
  %s0 = inlined_call_operand.vmem [shape: f32[2,4,256], index: 0, kind: input, shape index: {}]
  %s1 = inlined_call_operand.vmem [shape: f32[32,4], index: 1, kind: input, shape index: {}]
  %s2 = inlined_call_operand.vmem [shape: f32[32,1], index: 2, kind: input, shape index: {}]
  %s3 = inlined_call_operand.vmem [shape: f32[2,32,256], index: 3, kind: output, shape index: {}]
  %s4 = sld [smem:[#allocation0]]
  $region79: #{vector_neuron_layer.1} parent=0
    _
  %s6 = ssub.s32 1, %s4
  %s7 = scalar_select 0, %s6, %s4
  $region1: #{vector_neuron_layer.1} parent=0
    #allocation2 [shape = 'u8[32768]{0}', space=vmem, size = 0x8000, scoped, tag = 'output window, operand 0']
    loop: start=0, step=1, limit=6
    $region2: #{vector_neuron_layer.1} parent=1 // loop_pre_header
      _
    $region3: #{vector_neuron_layer.1} parent=1 // loop_header
      %s9 = sphi 0, %s13
      %p10 = scmp.ge.s32.totalorder %s9, 6
      %s16 = sphi 0, %s28
      %s17 = sphi 0, %s24
      %s18 = sphi 0, %s16
      %s19 = sphi 0, %s17
      %s20 = sphi 0, %s18
      %s21 = sphi 0, %s19
      %s33 = sphi 0, %s35
      %s36 = sphi 0, %s33
      %s37 = sphi 0, %s36
      %s53 = sphi 0, %s37
      %s57 = sphi 0, %s57
      %s59 = sphi 0, %s57
      %s60 = sphi 0, %s59
      %s74 = sphi 0, %s60
      %s78 = sphi 0, %s78
      %s80 = sphi 0, %s78
      %s81 = sphi 0, %s80
      %s95 = sphi 0, %s81
      %s103 = sphi 0, %s105
      %s106 = sphi 0, %s103
      %s107 = sphi 0, %s106
      %s123 = sphi 0, %s107
    $region4: #{vector_neuron_layer.1} parent=1 // loop_header_branch
      %12 = sbr.rel (%p10) target = $region8
    $region5: #{vector_neuron_layer.1} parent=1 // loop_body
      %s14 = ssub.s32 %s9, 1
      %s15 = ssub.s32 %s9, 2
      %s22 = sadd.s32 1, %s17
      %p23 = scmp.ge.s32.totalorder %s22, 2
      %s24 = scalar_select %p23, 0, %s22
      %s25 = sadd.s32 1, %s16
      %s26 = scalar_select %p23, %s25, %s16
      %p27 = scmp.ge.s32.totalorder %s26, 2
      %s28 = scalar_select %p27, 0, %s26
      %s29 = ssub.s32 %s16, %s28
      %s30 = ssub.s32 %s17, %s24
      %s31 = sor.u32 %s29, %s30
      %p32 = scmp.eq.s32.totalorder %s31, 0
      %s34 = sadd.s32 %s33, 1
      %s35 = scalar_select %p32, %s33, %s34
      %p38 = pneg %p32
      %p39 = scmp.eq.s32.totalorder %s9, 3
      %p40 = por %p38, %p39
      %p41 = scmp.ne.s32.totalorder %s33, %s36
      %p42 = scmp.eq.s32.totalorder %s9, 0
      %p43 = por %p41, %p42
      %p44 = scmp.ne.s32.totalorder %s33, %s36
      %p45 = scmp.eq.s32.totalorder %s14, 3
      %p46 = por %p44, %p45
      %p47 = scmp.ne.s32.totalorder %s36, %s37
      %p48 = scmp.eq.s32.totalorder %s14, 0
      %p49 = por %p47, %p48
      %p50 = scmp.ne.s32.totalorder %s36, %s37
      %p51 = scmp.eq.s32.totalorder %s15, 3
      %p52 = por %p50, %p51
      %p54 = scmp.ne.s32.totalorder %s37, %s53
      %p55 = scmp.eq.s32.totalorder %s15, 0
      %p56 = por %p54, %p55
      %s58 = sadd.s32 %s57, 1
      %p61 = scmp.eq.s32.totalorder %s9, 3
      %p62 = scmp.ne.s32.totalorder %s57, %s59
      %p63 = scmp.eq.s32.totalorder %s9, 0
      %p64 = por %p62, %p63
      %p65 = scmp.ne.s32.totalorder %s57, %s59
      %p66 = scmp.eq.s32.totalorder %s14, 3
      %p67 = por %p65, %p66
      %p68 = scmp.ne.s32.totalorder %s59, %s60
      %p69 = scmp.eq.s32.totalorder %s14, 0
      %p70 = por %p68, %p69
      %p71 = scmp.ne.s32.totalorder %s59, %s60
      %p72 = scmp.eq.s32.totalorder %s15, 3
      %p73 = por %p71, %p72
      %p75 = scmp.ne.s32.totalorder %s60, %s74
      %p76 = scmp.eq.s32.totalorder %s15, 0
      %p77 = por %p75, %p76
      %s79 = sadd.s32 %s78, 1
      %p82 = scmp.eq.s32.totalorder %s9, 3
      %p83 = scmp.ne.s32.totalorder %s78, %s80
      %p84 = scmp.eq.s32.totalorder %s9, 0
      %p85 = por %p83, %p84
      %p86 = scmp.ne.s32.totalorder %s78, %s80
      %p87 = scmp.eq.s32.totalorder %s14, 3
      %p88 = por %p86, %p87
      %p89 = scmp.ne.s32.totalorder %s80, %s81
      %p90 = scmp.eq.s32.totalorder %s14, 0
      %p91 = por %p89, %p90
      %p92 = scmp.ne.s32.totalorder %s80, %s81
      %p93 = scmp.eq.s32.totalorder %s15, 3
      %p94 = por %p92, %p93
      %p96 = scmp.ne.s32.totalorder %s81, %s95
      %p97 = scmp.eq.s32.totalorder %s15, 0
      %p98 = por %p96, %p97
      %s99 = ssub.s32 %s16, %s28
      %s100 = ssub.s32 %s17, %s24
      %s101 = sor.u32 %s99, %s100
      %p102 = scmp.eq.s32.totalorder %s101, 0
      %s104 = sadd.s32 %s103, 1
      %s105 = scalar_select %p102, %s103, %s104
      %p108 = pneg %p102
      %p109 = scmp.eq.s32.totalorder %s9, 3
      %p110 = por %p108, %p109
      %p111 = scmp.ne.s32.totalorder %s103, %s106
      %p112 = scmp.eq.s32.totalorder %s9, 0
      %p113 = por %p111, %p112
      %p114 = scmp.ne.s32.totalorder %s103, %s106
      %p115 = scmp.eq.s32.totalorder %s14, 3
      %p116 = por %p114, %p115
      %p117 = scmp.ne.s32.totalorder %s106, %s107
      %p118 = scmp.eq.s32.totalorder %s14, 0
      %p119 = por %p117, %p118
      %p120 = scmp.ne.s32.totalorder %s106, %s107
      %p121 = scmp.eq.s32.totalorder %s15, 3
      %p122 = por %p120, %p121
      %p124 = scmp.ne.s32.totalorder %s107, %s123
      %p125 = scmp.eq.s32.totalorder %s15, 0
      %p126 = por %p124, %p125
      %p127 = scmp.le.s32.totalorder 1, %s9
      %p128 = scmp.lt.s32.totalorder %s9, 5
      %p129 = pnand %p127, %p128
      %p130 = pneg %p129
      // Predicated region
      $region9: #{vector_neuron_layer.1} parent=5 // pred_check
        _
      $region10: #{vector_neuron_layer.1} parent=5 // pred_check_branch
        %132 = sbr.rel (%p129) target = $region12
      $region11: #{vector_neuron_layer.1} parent=5 // pred_region
        %s133 = ssub.s32 %s9, 1
        // Predicated region
        $region13: #{vector_neuron_layer.1} parent=11 // pred_check
          %p134 = pneg %p70
        $region14: #{vector_neuron_layer.1} parent=11 // pred_check_branch
          %136 = sbr.rel (%p134) target = $region16
        $region15: #{vector_neuron_layer.1} parent=11 // pred_region
          _
        $region16: #{vector_neuron_layer.1} parent=11 // pred_fallthru
          _
        // Predicated region
        $region17: #{vector_neuron_layer.1} parent=11 // pred_check
          %p137 = pneg %p91
        $region18: #{vector_neuron_layer.1} parent=11 // pred_check_branch
          %139 = sbr.rel (%p137) target = $region20
        $region19: #{vector_neuron_layer.1} parent=11 // pred_region
          _
        $region20: #{vector_neuron_layer.1} parent=11 // pred_fallthru
          _
      $region12: #{vector_neuron_layer.1} parent=5 // pred_fallthru
        _
      %p140 = scmp.lt.s32.totalorder %s9, 4
      // Predicated region
      $region21: #{vector_neuron_layer.1} parent=5 // pred_check
        %p141 = pneg %p140
      $region22: #{vector_neuron_layer.1} parent=5 // pred_check_branch
        %143 = sbr.rel (%p141) target = $region24
      $region23: #{vector_neuron_layer.1} parent=5 // pred_region
        // Predicated region
        $region25: #{vector_neuron_layer.1} parent=23 // pred_check
          %p144 = pneg %p43
        $region26: #{vector_neuron_layer.1} parent=23 // pred_check_branch
          %146 = sbr.rel (%p144) target = $region28
        $region27: #{vector_neuron_layer.1} parent=23 // pred_region
          %p147 = scmp.lt.s32.totalorder %s16, 1
          %s148 = scalar_select %p147, %s16, 1
          %p149 = scmp.lt.s32.totalorder %s17, 1
          %s150 = scalar_select %p149, %s17, 1
          %s151 = smul.addr %s148, 2
          %s152 = sadd.s32 %s150, %s151
          %s153 = smul.addr %s152, 4
          %s154 = scalar_lea.vmem %s0, %s153
        $region28: #{vector_neuron_layer.1} parent=23 // pred_fallthru
          _
      $region24: #{vector_neuron_layer.1} parent=5 // pred_fallthru
        _
      %p155 = scmp.le.s32.totalorder 1, %s9
      %p156 = scmp.lt.s32.totalorder %s9, 5
      %p157 = pnand %p155, %p156
      %p158 = pneg %p157
      // Predicated region
      $region29: #{vector_neuron_layer.1} parent=5 // pred_check
        _
      $region30: #{vector_neuron_layer.1} parent=5 // pred_check_branch
        %160 = sbr.rel (%p157) target = $region32
      $region31: #{vector_neuron_layer.1} parent=5 // pred_region
        %s161 = ssub.s32 %s9, 1
        %p162 = scmp.lt.s32.totalorder %s18, 1
        %s163 = scalar_select %p162, %s18, 1
        %p164 = scmp.lt.s32.totalorder %s19, 1
        %s165 = scalar_select %p164, %s19, 1
        %s166 = smul.addr %s163, 2
        %s167 = sadd.s32 %s165, %s166
        %s168 = smul.addr %s167, 4
        %s169 = scalar_lea.vmem %s0, %s168
        %p170 = pneg %p49
        %p171 = pneg %p46
        %p172 = pneg %p70
        %p173 = pneg %p67
        %p174 = pneg %p91
        %p175 = pneg %p88
        %p176 = pneg %p119
        %p177 = pneg %p116
        %s178 = sand.u32 %s106, 1
        %s179 = sand.u32 %s106, 1
        %s180 = smul.addr %s179, 32
        %s181 = scalar_lea.vmem [#allocation2], %s180
        %p182 = scmp.lt.s32.totalorder %s18, 1
        %s183 = scalar_select %p182, %s18, 1
        %p184 = scmp.lt.s32.totalorder %s19, 1
        %s185 = scalar_select %p184, %s19, 1
        %s186 = smul.addr %s183, 2
        %s187 = sadd.s32 %s185, %s186
        %s188 = smul.addr %s187, 4
        %s189 = scalar_lea.vmem %s0, %s188
        %v190 = vld [vmem:[%s1] sm:$0xff]
        %v191 = vld [vmem:[%s1 + $0x8] sm:$0xff]
        %v192 = vld [vmem:[%s1 + $0x10] sm:$0xff]
        %v193 = vld [vmem:[%s1 + $0x18] sm:$0xff]
        %v194 = vld [vmem:[%s189] sm:$0xf]
        %v195 = vld [vmem:[%s2] sm:$0xff]
        %v196 = vld [vmem:[%s2 + $0x8] sm:$0xff]
        %v197 = vld [vmem:[%s2 + $0x10] sm:$0xff]
        %v198 = vld [vmem:[%s2 + $0x18] sm:$0xff]
        %200 = vset.pattern.permute.xlu0 0
        %201 = vperm.xlu0 %200, %v195
        %v202 = vpop.permute.xlu0 %201
        %205 = vset.pattern.permute.xlu0 0
        %206 = vperm.xlu0 %205, %v196
        %v207 = vpop.permute.xlu0 %206
        %210 = vset.pattern.permute.xlu0 0
        %211 = vperm.xlu0 %210, %v197
        %v212 = vpop.permute.xlu0 %211
        %215 = vset.pattern.permute.xlu0 0
        %216 = vperm.xlu0 %215, %v198
        %v217 = vpop.permute.xlu0 %216
        %vm219 = vcmask 31744
        %v221 = vsel %vm219, %v190, 0
        %v224 = vsel %vm219, %v191, 0
        %v227 = vsel %vm219, %v192, 0
        %v230 = vsel %vm219, %v193, 0
        %vm232 = vcmask 1043456
        %v234 = vsel %vm232, %v194, 0
        %236 = vmatprep.subr.mxu0 0.0
        %237 = vmatpush1.msra.mxu0 %v234
        %238 = vmatprep.subr.mxu0 0.0
        %239 = vmatpush1.msra.mxu0 0.0
        %240 = vmatprep.subr.mxu0 0.0
        %241 = vmatpush1.msra.mxu0 0.0
        %242 = vmatprep.subr.mxu0 0.0
        %243 = vmatpush1.msra.mxu0 0.0
        %244 = vmatprep.subr.mxu0 0.0
        %245 = vmatpush1.msra.mxu0 0.0
        %246 = vmatprep.subr.mxu0 0.0
        %247 = vmatpush1.msra.mxu0 0.0
        %248 = vmatprep.subr.mxu0 0.0
        %249 = vmatpush1.msra.mxu0 0.0
        %250 = vmatprep.subr.mxu0 0.0
        %251 = vmatpush1.msra.mxu0 0.0
        %252 = vmatprep.subr.mxu0 0.0
        %253 = vmatpush1.msra.mxu0 0.0
        %254 = vmatprep.subr.mxu0 0.0
        %255 = vmatpush1.msra.mxu0 0.0
        %256 = vmatprep.subr.mxu0 0.0
        %257 = vmatpush1.msra.mxu0 0.0
        %258 = vmatprep.subr.mxu0 0.0
        %259 = vmatpush1.msra.mxu0 0.0
        %260 = vmatprep.subr.mxu0 0.0
        %261 = vmatpush1.msra.mxu0 0.0
        %262 = vmatprep.subr.mxu0 0.0
        %263 = vmatpush1.msra.mxu0 0.0
        %264 = vmatprep.subr.mxu0 0.0
        %265 = vmatpush1.msra.mxu0 0.0
        %266 = vmatprep.subr.mxu0 0.0
        %267 = vmatpush1.msra.mxu0 0.0
        %268 = vmatprep.subr.mxu0 0.0
        %269 = vmatpush1.msra.mxu0 0.0
        %270 = vmatprep.subr.mxu0 0.0
        %271 = vmatpush1.msra.mxu0 0.0
        %272 = vmatprep.subr.mxu0 0.0
        %273 = vmatpush1.msra.mxu0 0.0
        %274 = vmatprep.subr.mxu0 0.0
        %275 = vmatpush1.msra.mxu0 0.0
        %276 = vmatprep.subr.mxu0 0.0
        %277 = vmatpush1.msra.mxu0 0.0
        %278 = vmatprep.subr.mxu0 0.0
        %279 = vmatpush1.msra.mxu0 0.0
        %280 = vmatprep.subr.mxu0 0.0
        %281 = vmatpush1.msra.mxu0 0.0
        %282 = vmatprep.subr.mxu0 0.0
        %283 = vmatpush1.msra.mxu0 0.0
        %284 = vmatprep.subr.mxu0 0.0
        %285 = vmatpush1.msra.mxu0 0.0
        %286 = vmatprep.subr.mxu0 0.0
        %287 = vmatpush1.msra.mxu0 0.0
        %288 = vmatprep.subr.mxu0 0.0
        %289 = vmatpush1.msra.mxu0 0.0
        %290 = vmatprep.subr.mxu0 0.0
        %291 = vmatpush1.msra.mxu0 0.0
        %292 = vmatprep.subr.mxu0 0.0
        %293 = vmatpush1.msra.mxu0 0.0
        %294 = vmatprep.subr.mxu0 0.0
        %295 = vmatpush1.msra.mxu0 0.0
        %296 = vmatprep.subr.mxu0 0.0
        %297 = vmatpush1.msra.mxu0 0.0
        %298 = vmatprep.subr.mxu0 0.0
        %299 = vmatpush1.msra.mxu0 0.0
        %300 = vmatprep.mubr.f32.mxu0 0.0
        %301 = vmatmul.mubr.f32.gmra.mrb[0].mxu0 %v221
        %v302 = vpop.f32.mrb[0].mxu0
        %v303 = vadd.f32 %v202, %v302
        %v304 = vpop.f32.mrb[0].mxu0
        %305 = vmatprep.mubr.f32.mxu0 0.0
        %306 = vmatmul.mubr.f32.gmra.mrb[0].mxu0 %v224
        %v307 = vpop.f32.mrb[0].mxu0
        %v308 = vadd.f32 %v207, %v307
        %v309 = vpop.f32.mrb[0].mxu0
        %310 = vmatprep.mubr.f32.mxu0 0.0
        %311 = vmatmul.mubr.f32.gmra.mrb[0].mxu0 %v227
        %v312 = vpop.f32.mrb[0].mxu0
        %v313 = vadd.f32 %v212, %v312
        %v314 = vpop.f32.mrb[0].mxu0
        %315 = vmatprep.mubr.f32.mxu0 0.0
        %316 = vmatmul.mubr.f32.gmra.mrb[0].mxu0 %v230
        %v317 = vpop.f32.mrb[0].mxu0
        %v318 = vadd.f32 %v217, %v317
        %v319 = vpop.f32.mrb[0].mxu0
        %320 = vdwg.mxu0
        %v321 = vmax.f32 %v303, 0.0
        %v322 = vmax.f32 %v308, 0.0
        %v323 = vmax.f32 %v313, 0.0
        %v324 = vmax.f32 %v318, 0.0
        %325 = vst [vmem:[%s181] sm:$0xff] %v321
        %326 = vst [vmem:[%s181 + $0x8] sm:$0xff] %v322
        %327 = vst [vmem:[%s181 + $0x10] sm:$0xff] %v323
        %328 = vst [vmem:[%s181 + $0x18] sm:$0xff] %v324
        %s329 = sand.u32 %s106, 1
        %s330 = sand.u32 %s106, 1
        %s331 = smul.addr %s330, 32
        %s332 = scalar_lea.vmem [#allocation2], %s331
        // Predicated region
        $region33: #{vector_neuron_layer.1} parent=31 // pred_check
          %p333 = pneg %p116
        $region34: #{vector_neuron_layer.1} parent=31 // pred_check_branch
          %335 = sbr.rel (%p333) target = $region36
        $region35: #{vector_neuron_layer.1} parent=31 // pred_region
          %s336 = smul.addr %s18, 8
          %s337 = sadd.s32 %s19, %s336
          %s338 = smul.addr %s337, 8
          %s339 = scalar_lea.vmem %s3, %s338
          // Predicated region
          $region37: #{vector_neuron_layer.1} parent=35 // pred_check
            _
          $region38: #{vector_neuron_layer.1} parent=35 // pred_check_branch
            %341 = sbr.rel (0) target = $region40
          $region39: #{vector_neuron_layer.1} parent=35 // pred_region
            // Predicated region
            $region41: #{vector_neuron_layer.1} parent=39 // pred_check
              _
            $region42: #{vector_neuron_layer.1} parent=39 // pred_check_branch
              %343 = sbr.rel (0) target = $region44
            $region43: #{vector_neuron_layer.1} parent=39 // pred_region
              // Predicated region
              $region56: #{vector_neuron_layer.1} parent=43 // pred_check
                _
              $region57: #{vector_neuron_layer.1} parent=43 // pred_check_branch
                %364 = sbr.rel (0) target = $region59
              $region58: #{vector_neuron_layer.1} parent=43 // pred_region
                loop: start=0, step=1, limit=1
                $region60: #{vector_neuron_layer.1} parent=58 // loop_pre_header
                  _
                $region61: #{vector_neuron_layer.1} parent=58 // loop_header
                  %s366 = sphi 0, %s370
                  %p367 = scmp.ge.s32.totalorder %s366, 1
                  %s371 = sphi %s332, %s332
                  %s372 = sphi %s339, %s339
                $region62: #{vector_neuron_layer.1} parent=58 // loop_header_branch
                  %369 = sbr.rel (%p367) target = $region66
                $region63: #{vector_neuron_layer.1} parent=58 // loop_body
                  %v373 = vld [vmem:[%s371] sm:$0xff]
                  %374 = vst [vmem:[%s372] sm:$0xff] %v373
                  %v375 = vld [vmem:[%s371 + $0x8] sm:$0xff]
                  %376 = vst [vmem:[%s372 + $0x10] sm:$0xff] %v375
                  %v377 = vld [vmem:[%s371 + $0x10] sm:$0xff]
                  %378 = vst [vmem:[%s372 + $0x20] sm:$0xff] %v377
                  %v379 = vld [vmem:[%s371 + $0x18] sm:$0xff]
                  %380 = vst [vmem:[%s372 + $0x30] sm:$0xff] %v379
                $region64: #{vector_neuron_layer.1} parent=58 // loop_footer
                  %s370 = sadd.s32 1, %s366
                $region65: #{vector_neuron_layer.1} parent=58 // loop_footer_branch
                  %365 = sbr.rel target = $region61
                $region66: #{vector_neuron_layer.1} parent=58 // loop_exit
                  _
              $region59: #{vector_neuron_layer.1} parent=43 // pred_fallthru
                _
              // Predicated region
              $region67: #{vector_neuron_layer.1} parent=43 // pred_check
                _
              $region68: #{vector_neuron_layer.1} parent=43 // pred_check_branch
                %382 = sbr.rel target = $region70
              $region69: #{vector_neuron_layer.1} parent=43 // pred_region
                _
              $region70: #{vector_neuron_layer.1} parent=43 // pred_fallthru
                _
            $region44: #{vector_neuron_layer.1} parent=39 // pred_fallthru
              _
            // Predicated region
            $region45: #{vector_neuron_layer.1} parent=39 // pred_check
              _
            $region46: #{vector_neuron_layer.1} parent=39 // pred_check_branch
              %345 = sbr.rel target = $region48
            $region47: #{vector_neuron_layer.1} parent=39 // pred_region
              loop: start=0, step=1, limit=1
              $region49: #{vector_neuron_layer.1} parent=47 // loop_pre_header
                _
              $region50: #{vector_neuron_layer.1} parent=47 // loop_header
                %s348 = sphi 0, %s352
                %p349 = scmp.ge.s32.totalorder %s348, 1
                %s353 = sphi %s332, %s332
                %s354 = sphi %s339, %s339
              $region51: #{vector_neuron_layer.1} parent=47 // loop_header_branch
                %351 = sbr.rel (%p349) target = $region55
              $region52: #{vector_neuron_layer.1} parent=47 // loop_body
                %v355 = vld [vmem:[%s353] sm:$0xff]
                %356 = vst [vmem:[%s354] sm:$0xff] %v355
                %v357 = vld [vmem:[%s353 + $0x8] sm:$0xff]
                %358 = vst [vmem:[%s354 + $0x10] sm:$0xff] %v357
                %v359 = vld [vmem:[%s353 + $0x10] sm:$0xff]
                %360 = vst [vmem:[%s354 + $0x20] sm:$0xff] %v359
                %v361 = vld [vmem:[%s353 + $0x18] sm:$0xff]
                %362 = vst [vmem:[%s354 + $0x30] sm:$0xff] %v361
              $region53: #{vector_neuron_layer.1} parent=47 // loop_footer
                %s352 = sadd.s32 1, %s348
              $region54: #{vector_neuron_layer.1} parent=47 // loop_footer_branch
                %347 = sbr.rel target = $region50
              $region55: #{vector_neuron_layer.1} parent=47 // loop_exit
                _
            $region48: #{vector_neuron_layer.1} parent=39 // pred_fallthru
              _
          $region40: #{vector_neuron_layer.1} parent=35 // pred_fallthru
            _
          %383 = vnop
        $region36: #{vector_neuron_layer.1} parent=31 // pred_fallthru
          _
      $region32: #{vector_neuron_layer.1} parent=5 // pred_fallthru
        _
      %p384 = scmp.le.s32.totalorder 2, %s9
      // Predicated region
      $region71: #{vector_neuron_layer.1} parent=5 // pred_check
        %p385 = pneg %p384
      $region72: #{vector_neuron_layer.1} parent=5 // pred_check_branch
        %387 = sbr.rel (%p385) target = $region74
      $region73: #{vector_neuron_layer.1} parent=5 // pred_region
        %s388 = ssub.s32 %s9, 2
        // Predicated region
        $region75: #{vector_neuron_layer.1} parent=73 // pred_check
          %p389 = pneg %p122
        $region76: #{vector_neuron_layer.1} parent=73 // pred_check_branch
          %391 = sbr.rel (%p389) target = $region78
        $region77: #{vector_neuron_layer.1} parent=73 // pred_region
          %s392 = sand.u32 %s107, 1
          %s393 = sand.u32 %s107, 1
          %s394 = smul.addr %s393, 32
          %s395 = scalar_lea.vmem [#allocation2], %s394
        $region78: #{vector_neuron_layer.1} parent=73 // pred_fallthru
          _
      $region74: #{vector_neuron_layer.1} parent=5 // pred_fallthru
        _
    $region6: #{vector_neuron_layer.1} parent=1 // loop_footer
      %s13 = sadd.s32 1, %s9
    $region7: #{vector_neuron_layer.1} parent=1 // loop_footer_branch
      %8 = sbr.rel target = $region3
    $region8: #{vector_neuron_layer.1} parent=1 // loop_exit
      _

</llo_original>
